<compile_context>
chip_gen: v7x
topology: tpu7x:2x2x1
jax: 0.10.0
libtpu: 0.0.40
codegen_flags: <defaults>
</compile_context>

<pallas_src>
import jax
import jax.numpy as jnp
from jax.experimental import pallas as pl
from jax.experimental.pallas import tpu as pltpu

_HEAD_WIDTH = 128                 # lane-dense packed head width
_MAX_TB = 256                     # cap on batch rows per grid step
_X_BLOCK_BUDGET = 4 * 1024 * 1024  # ~4 MiB per (single-buffered) x block


def _step_policy_kernel(x_ref, w_ref, b_ref, out_ref):
    # x_ref:   [TB, C, HW]  input activations (NCHW with spatial flattened)
    # w_ref:   [C, 128]     packed heads, 1/HW pooling scale already folded in
    # b_ref:   [1, 128]     packed biases
    # out_ref: [TB, 128]    cols 0:2 = softmax(policy), col 2 = value, rest pad
    x = x_ref[...].astype(jnp.float32)

    # Global average pool: plain sum over spatial; the 1/HW scale lives in w.
    pooled = jnp.sum(x, axis=-1)                                   # [TB, C]

    # Single fused MXU matmul for both heads + bias.
    z = (jnp.dot(pooled, w_ref[...], preferred_element_type=jnp.float32)
         + b_ref[...])                                             # [TB, 128]

    # Softmax over the first 2 lanes only; leave the value lane untouched.
    col = jax.lax.broadcasted_iota(jnp.int32, z.shape, dimension=1)
    is_logit = col < 2
    masked = jnp.where(is_logit, z, -jnp.inf)
    m = jnp.max(masked, axis=-1, keepdims=True)
    e = jnp.where(is_logit, jnp.exp(masked - m), 0.0)
    denom = jnp.sum(e, axis=-1, keepdims=True)
    soft = e * pl.reciprocal(denom, approx=False)

    out_ref[...] = jnp.where(is_logit, soft, z).astype(out_ref.dtype)


@jax.jit
def _run_kernel(x_flat, w_packed, b_packed):
    B, C, HW = x_flat.shape
    row_bytes = C * HW * x_flat.dtype.itemsize

    # Pick TB from the VMEM budget; multiple of 8 when the batch is tiled.
    tb = min(_MAX_TB, max(8, _X_BLOCK_BUDGET // max(row_bytes, 1)))
    tb = max(8, (tb // 8) * 8)
    if B <= tb:
        TB, Bp = B, B                       # single block covers the batch
    else:
        TB = tb
        Bp = pl.cdiv(B, TB) * TB            # pad batch to a multiple of TB

    x_in = x_flat if Bp == B else jnp.pad(
        x_flat, ((0, Bp - B), (0, 0), (0, 0)))

    out = pl.pallas_call(
        _step_policy_kernel,
        out_shape=jax.ShapeDtypeStruct((Bp, _HEAD_WIDTH), jnp.float32),
        grid=(Bp // TB,),
        in_specs=[
            pl.BlockSpec((TB, C, HW), lambda i: (i, 0, 0)),
            pl.BlockSpec((C, _HEAD_WIDTH), lambda i: (0, 0)),
            pl.BlockSpec((1, _HEAD_WIDTH), lambda i: (0, 0)),
        ],
        out_specs=pl.BlockSpec((TB, _HEAD_WIDTH), lambda i: (i, 0)),
        compiler_params=pltpu.CompilerParams(
            dimension_semantics=("parallel",)),
    )(x_in, w_packed, b_packed)

    return out[:B]


class StepPolicy32Pallas:
    """JAX/Pallas re-implementation of StepPolicy32 (forward pass)."""

    def __init__(self, layer_config, key):
        in_dim = ([16] + [16] * layer_config[0] + [32] * layer_config[1]
                  + [64] * (layer_config[2] - 1))
        self.in_dim = in_dim
        self.pnet = []          # list of (weight [2, dim], bias [2]) (PyTorch layout)
        self.vnet = []          # list of (weight [1, dim], bias [1])
        self._packed_w = []     # [dim, 128] packed heads (unscaled)
        self._packed_b = []     # [1, 128]   packed biases
        self._scaled_w = {}     # (t, HW) -> packed weight with 1/HW folded in
        for dim in in_dim:
            key, k1, k2, k3, k4 = jax.random.split(key, 5)
            bound = 1.0 / (dim ** 0.5)
            pw = jax.random.uniform(k1, (2, dim), jnp.float32, -bound, bound)
            pb = jax.random.uniform(k2, (2,), jnp.float32, -bound, bound)
            vw = jax.random.uniform(k3, (1, dim), jnp.float32, -bound, bound)
            vb = jax.random.uniform(k4, (1,), jnp.float32, -bound, bound)
            self.pnet.append((pw, pb))
            self.vnet.append((vw, vb))
            # Build the lane-dense packed head once at init (no per-call glue).
            w = jnp.zeros((dim, _HEAD_WIDTH), jnp.float32)
            w = w.at[:, 0:2].set(pw.T).at[:, 2:3].set(vw.T)
            b = jnp.zeros((1, _HEAD_WIDTH), jnp.float32)
            b = b.at[0, 0:2].set(pb).at[0, 2:3].set(vb)
            self._packed_w.append(w)
            self._packed_b.append(b)

    def _scaled_weight(self, t, hw):
        # Fold the 1/HW pooling scale into the packed weight, once per (t, HW).
        cache_key = (t, hw)
        w = self._scaled_w.get(cache_key)
        if w is None:
            w = self._packed_w[t] * (1.0 / float(hw))
            self._scaled_w[cache_key] = w
        return w

    def __call__(self, state):
        x, t = state                        # x: [B, C, H, W] (NCHW), t: python int
        B, C, H, W = x.shape
        assert C == self.in_dim[t], "channel count must match in_dim[t]"
        hw = H * W
        x_flat = x.reshape(B, C, hw)        # layout glue only (free view)
        out = _run_kernel(x_flat, self._scaled_weight(t, hw), self._packed_b[t])
        logit = out[:, 0:2]                 # softmax(policy)
        value = out[:, 2:3]                 # value head
        return logit, value


def _reference_forward(model, state):
    """Plain-JAX reference for a correctness check."""
    x, t = state
    B, C, H, W = x.shape
    pooled = jnp.mean(x.reshape(B, C, H * W), axis=-1)
    pw, pb = model.pnet[t]
    vw, vb = model.vnet[t]
    logits = pooled @ pw.T + pb
    logit = jax.nn.softmax(logits, axis=1)
    value = pooled @ vw.T + vb
    return logit, value


def _check(model, x, t):
    logit, value = model((x, t))
    jax.block_until_ready((logit, value))
    ref_logit, ref_value = _reference_forward(model, (x, t))
    B = x.shape[0]
    assert logit.shape == (B, 2) and value.shape == (B, 1)
    assert jnp.allclose(logit, ref_logit, atol=1e-5, rtol=1e-5)
    assert jnp.allclose(value, ref_value, atol=1e-5, rtol=1e-5)


if __name__ == "__main__":
    key = jax.random.PRNGKey(0)
    k_model, k_x1, k_x2 = jax.random.split(key, 3)

    layer_config = [2, 2, 2]
    model = StepPolicy32Pallas(layer_config, k_model)
    # in_dim = [16, 16, 16, 32, 32, 64]

    # Case 1: t = 0 -> 16 input channels, small batch (single-block path).
    x1 = jax.random.normal(k_x1, (2, 16, 16, 16), dtype=jnp.float32)
    _check(model, x1, t=0)

    # Case 2: t = 3 -> 32 input channels, bigger batch (exercises batch
    # tiling + zero-padding of the trailing partial tile would trigger only
    # for very large B; here it stays single-block but uses a different head).
    x2 = jax.random.normal(k_x2, (40, 32, 8, 8), dtype=jnp.float32)
    _check(model, x2, t=3)

    print("KERNEL_OK")
</pallas_src>

<mosaic_0001>
module attributes {stable_mosaic.version = 11 : i64} {
  func.func @_step_policy_kernel(%arg0: i32, %arg1: memref<2x16x256xf32, #tpu.memory_space<vmem>>, %arg2: memref<16x128xf32, #tpu.memory_space<vmem>>, %arg3: memref<1x128xf32, #tpu.memory_space<vmem>>, %arg4: memref<2x128xf32, #tpu.memory_space<vmem>>) attributes {dimension_semantics = [#tpu.dimension_semantics<parallel>], iteration_bounds = array<i64: 1>, scalar_prefetch = 0 : i64, scratch_operands = 0 : i64, tpu.core_type = #tpu.core_type<tc>, window_params = [{transform_indices = @transform_0, window_bounds = array<i64: 2, 16, 256>}, {pipeline_mode = #tpu.pipeline_mode<synchronous>, transform_indices = @transform_1, window_bounds = array<i64: 16, 128>}, {pipeline_mode = #tpu.pipeline_mode<synchronous>, transform_indices = @transform_2, window_bounds = array<i64: 1, 128>}, {transform_indices = @transform_3, window_bounds = array<i64: 2, 128>}]} {
    %c0 = arith.constant 0 : index
    %c0_0 = arith.constant 0 : index
    %c0_1 = arith.constant 0 : index
    %0 = vector.load %arg1[%c0, %c0_0, %c0_1] : memref<2x16x256xf32, #tpu.memory_space<vmem>>, vector<2x16x256xf32>
    %cst = arith.constant dense<0.000000e+00> : vector<2x16xf32>
    %1 = vector.multi_reduction <add>, %0, %cst [2] : vector<2x16x256xf32> to vector<2x16xf32>
    %c0_2 = arith.constant 0 : index
    %c0_3 = arith.constant 0 : index
    %2 = vector.load %arg2[%c0_2, %c0_3] : memref<16x128xf32, #tpu.memory_space<vmem>>, vector<16x128xf32>
    %cst_4 = arith.constant dense<0.000000e+00> : vector<2x128xf32>
    %3 = tpu.matmul %1, %2, %cst_4 {dimension_numbers = #tpu.dot_dimension_numbers<[1], [0], [0], [1], [0, 0, 1, 1], [], []>} : vector<2x16xf32>, vector<16x128xf32>, vector<2x128xf32> -> vector<2x128xf32>
    %c0_5 = arith.constant 0 : index
    %c0_6 = arith.constant 0 : index
    %4 = vector.load %arg3[%c0_5, %c0_6] : memref<1x128xf32, #tpu.memory_space<vmem>>, vector<1x128xf32>
    %5 = vector.broadcast %4 : vector<1x128xf32> to vector<2x128xf32>
    %6 = arith.addf %3, %5 : vector<2x128xf32>
    %7 = tpu.iota {dimensions = array<i32: 1>} : vector<2x128xi32>
    %c2_i32 = arith.constant 2 : i32
    %8 = vector.broadcast %c2_i32 : i32 to vector<2x128xi32>
    %9 = arith.cmpi slt, %7, %8 : vector<2x128xi32>
    %cst_7 = arith.constant 0xFF800000 : f32
    %10 = vector.broadcast %cst_7 : f32 to vector<2x128xf32>
    %11 = arith.select %9, %6, %10 : vector<2x128xi1>, vector<2x128xf32>
    %cst_8 = arith.constant dense<0xFF800000> : vector<2xf32>
    %12 = vector.multi_reduction <maximumf>, %11, %cst_8 [1] : vector<2x128xf32> to vector<2xf32>
    %13 = vector.shape_cast %12 : vector<2xf32> to vector<2x1xf32>
    %14 = vector.broadcast %13 : vector<2x1xf32> to vector<2x128xf32>
    %15 = arith.subf %11, %14 : vector<2x128xf32>
    %16 = math.exp %15 : vector<2x128xf32>
    %cst_9 = arith.constant 0.000000e+00 : f32
    %17 = vector.broadcast %cst_9 : f32 to vector<2x128xf32>
    %18 = arith.select %9, %16, %17 : vector<2x128xi1>, vector<2x128xf32>
    %cst_10 = arith.constant dense<0.000000e+00> : vector<2xf32>
    %19 = vector.multi_reduction <add>, %18, %cst_10 [1] : vector<2x128xf32> to vector<2xf32>
    %20 = vector.shape_cast %19 : vector<2xf32> to vector<2x1xf32>
    %21 = tpu.reciprocal %20 : vector<2x1xf32> -> vector<2x1xf32>
    %22 = vector.broadcast %21 : vector<2x1xf32> to vector<2x128xf32>
    %23 = arith.mulf %18, %22 : vector<2x128xf32>
    %24 = arith.select %9, %23, %6 : vector<2x128xi1>, vector<2x128xf32>
    %c0_11 = arith.constant 0 : index
    %c0_12 = arith.constant 0 : index
    %25 = vector.load %arg4[%c0_11, %c0_12] : memref<2x128xf32, #tpu.memory_space<vmem>>, vector<2x128xf32>
    tpu.vector_store %arg4[%c0_11, %c0_12], %24 {strides = array<i32>} : memref<2x128xf32, #tpu.memory_space<vmem>>, vector<2x128xf32>,
    return
  }
  func.func @transform_0(%arg0: i32) -> (i32, i32, i32) {
    %c0_i32 = arith.constant 0 : i32
    %c0_i32_0 = arith.constant 0 : i32
    %c0_i32_1 = arith.constant 0 : i32
    return %arg0, %c0_i32, %c0_i32_0 : i32, i32, i32
  }
  func.func @transform_1(%arg0: i32) -> (i32, i32) {
    %c0_i32 = arith.constant 0 : i32
    %c0_i32_0 = arith.constant 0 : i32
    %c0_i32_1 = arith.constant 0 : i32
    return %c0_i32, %c0_i32_0 : i32, i32
  }
  func.func @transform_2(%arg0: i32) -> (i32, i32) {
    %c0_i32 = arith.constant 0 : i32
    %c0_i32_0 = arith.constant 0 : i32
    %c0_i32_1 = arith.constant 0 : i32
    return %c0_i32, %c0_i32_0 : i32, i32
  }
  func.func @transform_3(%arg0: i32) -> (i32, i32) {
    %c0_i32 = arith.constant 0 : i32
    %c0_i32_0 = arith.constant 0 : i32
    return %arg0, %c0_i32 : i32, i32
  }
}

</mosaic_0001>

<llo_original>
// kernel: _run_kernel.1
$region0: #{_run_kernel.1}
  #allocation0 [shape = 'u32[]', space=smem, size = 0x4, offset = 0x4, fixed_abs, tag = 'smem constant byte address 0x4 - core index']
  #allocation1 [shape = 'u32[144,128]{1,0:T(1,128)}', space=vmem, size = 0x12000, scoped, tag = 'internal scratch']
  %s0 = inlined_call_operand.hbm [shape: f32[2,16,256], index: 0, kind: input, shape index: {}]
  %s1 = inlined_call_operand.hbm [shape: f32[16,128], index: 1, kind: input, shape index: {}]
  %s2 = inlined_call_operand.vmem [shape: f32[1,128], index: 2, kind: input, shape index: {}]
  %s3 = inlined_call_operand.hbm [shape: f32[2,128], index: 3, kind: output, shape index: {}]
  %s4 = sld [smem:[#allocation0]]
  $region30: #{_run_kernel.1} parent=0
    _
  %s6 = ssub.s32 1, %s4
  %s7 = scalar_select 0, %s6, %s4
  $region1: #{_run_kernel.1} parent=0
    #allocation2 [shape = 'u8[32768]{0}', space=vmem, size = 0x8000, scoped, tag = 'input window, operand 0, single buffered']
    #allocation3 [shape = 's32[1]{0}', space=sflag, size = 0x4, scoped, tag = 'scoped memory for _run_kernel.1']
    #allocation4 [shape = 's32[1]{0}', space=sflag, size = 0x4, scoped, tag = 'scoped memory for _run_kernel.1']
    #allocation5 [shape = 'u8[8192]{0}', space=vmem, size = 0x2000, scoped, tag = 'input window, operand 1, single buffered']
    #allocation6 [shape = 's32[1]{0}', space=sflag, size = 0x4, scoped, tag = 'scoped memory for _run_kernel.1']
    #allocation7 [shape = 'u8[1024]{0}', space=vmem, size = 0x400, scoped, tag = 'output window, operand 0, single buffered']
    %8 = vsyncpa [#allocation3], 0
    %9 = vsyncpa [#allocation6], 0
    %10 = vsyncpa [#allocation4], 0
    // Predicated region
    $region2: #{_run_kernel.1} parent=1 // pred_check
      _
    $region3: #{_run_kernel.1} parent=1 // pred_check_branch
      %12 = sbr.rel (0) target = $region5
    $region4: #{_run_kernel.1} parent=1 // pred_region
      %s14 = ssub.s32 1024, 1024
      %15 = vsyncadd [#allocation3], %s14
      %s16 = sshll.u32 [#allocation2], 4
      %s17 = int_to_ptr.vmem [resolvable:$true] %s16
      %22 = dma.hbm_to_vmem [thread:$0]  %s0, 1024, %s17, [#allocation3], 256, 256, 16
    $region5: #{_run_kernel.1} parent=1 // pred_fallthru
      _
    // Predicated region
    $region6: #{_run_kernel.1} parent=1 // pred_check
      _
    $region7: #{_run_kernel.1} parent=1 // pred_check_branch
      %24 = sbr.rel (0) target = $region9
    $region8: #{_run_kernel.1} parent=1 // pred_region
      %s26 = ssub.s32 256, 256
      %27 = vsyncadd [#allocation6], %s26
      %s28 = sshll.u32 [#allocation5], 4
      %s29 = int_to_ptr.vmem [resolvable:$true] %s28
      %34 = dma.hbm_to_vmem [thread:$0]  %s1, 256, %s29, [#allocation6], 128, 128, 8
    $region9: #{_run_kernel.1} parent=1 // pred_fallthru
      _
    // Predicated region
    $region10: #{_run_kernel.1} parent=1 // pred_check
      _
    $region11: #{_run_kernel.1} parent=1 // pred_check_branch
      %36 = sbr.rel (0) target = $region13
    $region12: #{_run_kernel.1} parent=1 // pred_region
      _
    $region13: #{_run_kernel.1} parent=1 // pred_fallthru
      _
    // Predicated region
    $region14: #{_run_kernel.1} parent=1 // pred_check
      _
    $region15: #{_run_kernel.1} parent=1 // pred_check_branch
      %38 = sbr.rel (0) target = $region17
    $region16: #{_run_kernel.1} parent=1 // pred_region
      %39 = dma.done [#allocation3], 1024
    $region17: #{_run_kernel.1} parent=1 // pred_fallthru
      _
    // Predicated region
    $region18: #{_run_kernel.1} parent=1 // pred_check
      _
    $region19: #{_run_kernel.1} parent=1 // pred_check_branch
      %41 = sbr.rel (0) target = $region21
    $region20: #{_run_kernel.1} parent=1 // pred_region
      %42 = dma.done [#allocation6], 256
    $region21: #{_run_kernel.1} parent=1 // pred_fallthru
      _
    %v43 = vld [vmem:[#allocation2] sm:$0xff]
    %v44 = vld [vmem:[#allocation2 + $0x8] sm:$0xff]
    %v45 = vld [vmem:[#allocation2 + $0x10] sm:$0xff]
    %v46 = vld [vmem:[#allocation2 + $0x18] sm:$0xff]
    %v47 = vld [vmem:[#allocation2 + $0x20] sm:$0xff]
    %v48 = vld [vmem:[#allocation2 + $0x28] sm:$0xff]
    %v49 = vld [vmem:[#allocation2 + $0x30] sm:$0xff]
    %v50 = vld [vmem:[#allocation2 + $0x38] sm:$0xff]
    %v51 = vadd.f32 %v43, %v44
    %52 = vadd.xlane.f32.xlu0 %v51
    %v53 = vpop.xlane.xlu0 %52
    %v54 = vadd.f32 %v45, %v46
    %55 = vadd.xlane.f32.xlu0 %v54
    %v56 = vpop.xlane.xlu0 %55
    %v57 = vadd.f32 %v47, %v48
    %58 = vadd.xlane.f32.xlu0 %v57
    %v59 = vpop.xlane.xlu0 %58
    %v60 = vadd.f32 %v49, %v50
    %61 = vadd.xlane.f32.xlu0 %v60
    %v62 = vpop.xlane.xlu0 %61
    %v63 = vld [vmem:[#allocation5] sm:$0xff]
    %v64 = vld [vmem:[#allocation5 + $0x8] sm:$0xff]
    %v65 = vld [vmem:[%s2] sm:$0x1]
    %v67 = vlaneseq
    %v68 = vshrl.u32 %v67, 7
    %v69 = vsub.s32 0, %v68
    %v70 = vrot.slane %v65, %v69
    %v76 = vlaneseq
    %v77 = vand.u32 %v76, 127
    %v78 = vlaneseq
    %v79 = vshrl.u32 %v78, 7
    %v80 = vsub.s32 %v77, %v79
    %v81 = vrot.slane %v53, %v80
    %v82 = vadd.s32 %v77, 4294967288
    %v83 = vlaneseq
    %v84 = vshrl.u32 %v83, 7
    %v85 = vsub.s32 %v82, %v84
    %v86 = vrot.slane %v56, %v85
    %vm87 = vcmask 130112
    %v88 = vsel %vm87, %v86, %v81
    %v89 = vlaneseq
    %v90 = vshrl.u32 %v89, 7
    %v91 = vsub.s32 %v77, %v90
    %v92 = vrot.slane %v59, %v91
    %v93 = vlaneseq
    %v94 = vshrl.u32 %v93, 7
    %v95 = vsub.s32 %v82, %v94
    %v96 = vrot.slane %v62, %v95
    %v97 = vsel %vm87, %v96, %v92
    %vm98 = vcmask 1041409
    %v99 = vsel %vm98, %v97, %v88
    %vm100 = vcmask 130048
    %v101 = vsel %vm100, %v99, 0
    %103 = vmatprep.subr.mxu0 0.0
    %104 = vmatpush1.msra.mxu0 %v63
    %105 = vmatprep.subr.mxu0 0.0
    %106 = vmatpush1.msra.mxu0 %v64
    %107 = vmatprep.subr.mxu0 0.0
    %108 = vmatpush1.msra.mxu0 0.0
    %109 = vmatprep.subr.mxu0 0.0
    %110 = vmatpush1.msra.mxu0 0.0
    %111 = vmatprep.subr.mxu0 0.0
    %112 = vmatpush1.msra.mxu0 0.0
    %113 = vmatprep.subr.mxu0 0.0
    %114 = vmatpush1.msra.mxu0 0.0
    %115 = vmatprep.subr.mxu0 0.0
    %116 = vmatpush1.msra.mxu0 0.0
    %117 = vmatprep.subr.mxu0 0.0
    %118 = vmatpush1.msra.mxu0 0.0
    %119 = vmatprep.subr.mxu0 0.0
    %120 = vmatpush1.msra.mxu0 0.0
    %121 = vmatprep.subr.mxu0 0.0
    %122 = vmatpush1.msra.mxu0 0.0
    %123 = vmatprep.subr.mxu0 0.0
    %124 = vmatpush1.msra.mxu0 0.0
    %125 = vmatprep.subr.mxu0 0.0
    %126 = vmatpush1.msra.mxu0 0.0
    %127 = vmatprep.subr.mxu0 0.0
    %128 = vmatpush1.msra.mxu0 0.0
    %129 = vmatprep.subr.mxu0 0.0
    %130 = vmatpush1.msra.mxu0 0.0
    %131 = vmatprep.subr.mxu0 0.0
    %132 = vmatpush1.msra.mxu0 0.0
    %133 = vmatprep.subr.mxu0 0.0
    %134 = vmatpush1.msra.mxu0 0.0
    %135 = vmatprep.subr.mxu0 0.0
    %136 = vmatpush1.msra.mxu0 0.0
    %137 = vmatprep.subr.mxu0 0.0
    %138 = vmatpush1.msra.mxu0 0.0
    %139 = vmatprep.subr.mxu0 0.0
    %140 = vmatpush1.msra.mxu0 0.0
    %141 = vmatprep.subr.mxu0 0.0
    %142 = vmatpush1.msra.mxu0 0.0
    %143 = vmatprep.subr.mxu0 0.0
    %144 = vmatpush1.msra.mxu0 0.0
    %145 = vmatprep.subr.mxu0 0.0
    %146 = vmatpush1.msra.mxu0 0.0
    %147 = vmatprep.subr.mxu0 0.0
    %148 = vmatpush1.msra.mxu0 0.0
    %149 = vmatprep.subr.mxu0 0.0
    %150 = vmatpush1.msra.mxu0 0.0
    %151 = vmatprep.subr.mxu0 0.0
    %152 = vmatpush1.msra.mxu0 0.0
    %153 = vmatprep.subr.mxu0 0.0
    %154 = vmatpush1.msra.mxu0 0.0
    %155 = vmatprep.subr.mxu0 0.0
    %156 = vmatpush1.msra.mxu0 0.0
    %157 = vmatprep.subr.mxu0 0.0
    %158 = vmatpush1.msra.mxu0 0.0
    %159 = vmatprep.subr.mxu0 0.0
    %160 = vmatpush1.msra.mxu0 0.0
    %161 = vmatprep.subr.mxu0 0.0
    %162 = vmatpush1.msra.mxu0 0.0
    %163 = vmatprep.subr.mxu0 0.0
    %164 = vmatpush1.msra.mxu0 0.0
    %165 = vmatprep.subr.mxu0 0.0
    %166 = vmatpush1.msra.mxu0 0.0
    %167 = vmatprep.mubr.f32.mxu0 0.0
    %168 = vmatmul.mubr.f32.gmra.mrb[0].mxu0 %v101
    %v169 = vpop.f32.mrb[0].mxu0
    %v170 = vadd.f32 %v70, %v169
    %v171 = vpop.f32.mrb[0].mxu0
    %172 = vdwg.mxu0
    %vm173 = vcmp.lt.s32.totalorder %v77, 2
    %v174 = vsel %vm173, %v170, -inf
    %vm175 = vcmask 1041408
    %v176 = vsel %vm175, %v174, -inf
    %177 = vmax.xlane.f32.xlu0 %v176
    %v178 = vpop.xlane.xlu0 %177
    %v179 = vsub.f32 %v174, %v178
    %v180 = vmul.f32 %v179, 1.442695
    %v181 = vpow.pop %v180
    %v182 = vsel %vm173, %v181, 0.0
    %v183 = vsel %vm175, %v182, 0.0
    %184 = vadd.xlane.f32.xlu0 %v183
    %v185 = vpop.xlane.xlu0 %184
    %v186 = vrcp.pop %v185
    %v187 = vmul.f32 %v182, %v186
    %v188 = vsel %vm173, %v187, %v170
    %189 = vst [vmem:[#allocation7] sm:$0x3] %v188
    // Predicated region
    $region22: #{_run_kernel.1} parent=1 // pred_check
      _
    $region23: #{_run_kernel.1} parent=1 // pred_check_branch
      %191 = sbr.rel (0) target = $region25
    $region24: #{_run_kernel.1} parent=1 // pred_region
      %s193 = ssub.s32 32, 32
      %194 = vsyncadd [#allocation4], %s193
      %s196 = sshll.u32 [#allocation7], 4
      %s197 = int_to_ptr.vmem [resolvable:$true] %s196
      %199 = dma.vmem_to_hbm [thread:$0]  %s197, 32, %s3, [#allocation4]
    $region25: #{_run_kernel.1} parent=1 // pred_fallthru
      _
    // Predicated region
    $region26: #{_run_kernel.1} parent=1 // pred_check
      _
    $region27: #{_run_kernel.1} parent=1 // pred_check_branch
      %201 = sbr.rel (0) target = $region29
    $region28: #{_run_kernel.1} parent=1 // pred_region
      %202 = dma.done [#allocation4], 32
    $region29: #{_run_kernel.1} parent=1 // pred_fallthru
      _
    %203 = vsyncpa [#allocation3], 1
    %204 = vsyncpa [#allocation6], 1
    %205 = vsyncpa [#allocation4], 1

</llo_original>
